<compile_context>
chip_gen: v6e
topology: v6e:2x2x1
jax: 0.10.0
libtpu: 0.0.40
codegen_flags: <defaults>
</compile_context>

<pallas_src>
import functools

import jax
import jax.numpy as jnp
from jax.experimental import pallas as pl
from jax.experimental.pallas import tpu as pltpu


# ---------------------------------------------------------------------------
# Phase 1: pooled mean over L  ->  gate y = sigmoid(relu(pooled @ w1) @ w2)
# ---------------------------------------------------------------------------
def _se_gate_kernel(x_ref, w1_ref, w2_ref, y_ref, acc_ref, *, inv_l):
    k = pl.program_id(0)

    @pl.when(k == 0)
    def _():
        acc_ref[...] = jnp.zeros_like(acc_ref)

    # Accumulate the per-(B, C) sum over this L tile (lane-axis reduce).
    acc_ref[...] += jnp.sum(x_ref[...].astype(jnp.float32), axis=-1)

    @pl.when(k == pl.num_programs(0) - 1)
    def _():
        # Exact mean over the full L (sum * 1/L), independent of the tiling.
        pooled = acc_ref[...] * inv_l                                   # (B, C)
        h = jnp.dot(pooled, w1_ref[...], preferred_element_type=jnp.float32)
        h = jnp.maximum(h, 0.0)                                         # (B, H)
        y = jnp.dot(h, w2_ref[...], preferred_element_type=jnp.float32)  # (B, C)
        y_ref[...] = jax.nn.sigmoid(y).astype(y_ref.dtype)


# ---------------------------------------------------------------------------
# Phase 2: streaming, lane-dense broadcast scale   o = x * y[:, :, None]
# ---------------------------------------------------------------------------
def _se_scale_kernel(y_ref, x_ref, o_ref):
    o_ref[...] = x_ref[...] * y_ref[...][:, :, None]


def _choose_l_tile(L, row_bytes, max_tile_bytes=2 << 20):
    """Largest multiple of 128 that divides L and keeps one tile under the byte
    cap (sized so double-buffered in+out tiles stay well inside v7x's 64 MiB
    VMEM).  Falls back to the full extent when L is not 128-aligned, which is
    always a legal block shape."""
    if L % 128 != 0:
        return L
    cap = max(128, (max_tile_bytes // max(row_bytes, 1)) // 128 * 128)
    tl = 128
    cand = 128
    while cand <= min(L, cap):
        if L % cand == 0:
            tl = cand
        cand += 128
    return tl


def se_block(x, w1, w2, *, l_tile=None):
    B, C, L = x.shape
    H = w1.shape[1]
    assert w1.shape == (C, H) and w2.shape == (H, C)

    itemsize = jnp.dtype(x.dtype).itemsize
    if l_tile is None:
        l_tile = _choose_l_tile(L, B * C * itemsize)
    assert L % l_tile == 0, "L must be divisible by the chosen L tile"
    n_l = L // l_tile

    # ---- phase 1: reduction over L tiles, finalize the tiny MLP gate once ----
    gate = pl.pallas_call(
        functools.partial(_se_gate_kernel, inv_l=1.0 / L),
        out_shape=jax.ShapeDtypeStruct((B, C), jnp.float32),
        grid_spec=pltpu.PrefetchScalarGridSpec(
            num_scalar_prefetch=0,
            grid=(n_l,),
            in_specs=[
                pl.BlockSpec((B, C, l_tile), lambda k: (0, 0, k)),
                pl.BlockSpec((C, H), lambda k: (0, 0)),   # weights stay resident
                pl.BlockSpec((H, C), lambda k: (0, 0)),
            ],
            out_specs=pl.BlockSpec((B, C), lambda k: (0, 0)),
            scratch_shapes=[pltpu.VMEM((B, C), jnp.float32)],
        ),
        compiler_params=pltpu.CompilerParams(
            dimension_semantics=("arbitrary",),  # reduction axis over L
        ),
        cost_estimate=pl.CostEstimate(
            flops=B * C * L + 4 * B * C * H,
            transcendentals=B * C,
            bytes_accessed=(B * C * L + 2 * C * H + B * C) * itemsize,
        ),
    )(x, w1, w2)

    # ---- phase 2: tiled, double-buffered, lane-dense broadcast multiply ----
    out = pl.pallas_call(
        _se_scale_kernel,
        out_shape=jax.ShapeDtypeStruct((B, C, L), x.dtype),
        grid_spec=pltpu.PrefetchScalarGridSpec(
            num_scalar_prefetch=0,
            grid=(n_l,),
            in_specs=[
                pl.BlockSpec((B, C), lambda k: (0, 0)),            # gate resident in VMEM
                pl.BlockSpec((B, C, l_tile), lambda k: (0, 0, k)),
            ],
            out_specs=pl.BlockSpec((B, C, l_tile), lambda k: (0, 0, k)),
        ),
        compiler_params=pltpu.CompilerParams(
            dimension_semantics=("parallel",),   # independent L tiles -> both TCs on v7x
        ),
        cost_estimate=pl.CostEstimate(
            flops=B * C * L,
            transcendentals=0,
            bytes_accessed=2 * B * C * L * itemsize + B * C * itemsize,
        ),
    )(gate.astype(x.dtype), x)

    return out


def se_block_ref(x, w1, w2):
    pooled = jnp.mean(x, axis=-1)
    h = jnp.maximum(pooled @ w1, 0.0)
    y = jax.nn.sigmoid(h @ w2)
    return x * y[:, :, None]


if __name__ == "__main__":
    key = jax.random.PRNGKey(0)
    B, C, L = 2, 64, 512
    reduction = 16
    H = C // reduction

    kx, k1, k2 = jax.random.split(key, 3)
    x = jax.random.normal(kx, (B, C, L), dtype=jnp.float32)
    # Deterministic synthetic weights with the Linear shapes (pre-transposed).
    w1 = jax.random.normal(k1, (C, H), dtype=jnp.float32) * 0.1  # Linear(C->H).weight.T
    w2 = jax.random.normal(k2, (H, C), dtype=jnp.float32) * 0.1  # Linear(H->C).weight.T

    # Explicit small tile -> exercises the multi-step accumulation path (grid=4).
    out = jax.block_until_ready(se_block(x, w1, w2, l_tile=128))
    # Auto-chosen (largest legal) tile.
    out_auto = jax.block_until_ready(se_block(x, w1, w2))

    ref = se_block_ref(x, w1, w2)
    assert out.shape == (B, C, L)
    assert jnp.allclose(out, ref, atol=1e-5, rtol=1e-5)
    assert jnp.allclose(out_auto, ref, atol=1e-5, rtol=1e-5)

    print("KERNEL_OK")
</pallas_src>

<mosaic_0001>
module attributes {stable_mosaic.version = 11 : i64} {
  func.func @_se_gate_kernel(%arg0: i32, %arg1: memref<2x64x128xf32, #tpu.memory_space<vmem>>, %arg2: memref<64x4xf32, #tpu.memory_space<vmem>>, %arg3: memref<4x64xf32, #tpu.memory_space<vmem>>, %arg4: memref<2x64xf32, #tpu.memory_space<vmem>>, %arg5: memref<2x64xf32, #tpu.memory_space<vmem>>) attributes {dimension_semantics = [#tpu.dimension_semantics<arbitrary>], iteration_bounds = array<i64: 4>, scalar_prefetch = 0 : i64, scratch_operands = 1 : i64, tpu.core_type = #tpu.core_type<tc>, window_params = [{transform_indices = @transform_0, window_bounds = array<i64: 2, 64, 128>}, {pipeline_mode = #tpu.pipeline_mode<synchronous>, transform_indices = @transform_1, window_bounds = array<i64: 64, 4>}, {pipeline_mode = #tpu.pipeline_mode<synchronous>, transform_indices = @transform_2, window_bounds = array<i64: 4, 64>}, {pipeline_mode = #tpu.pipeline_mode<synchronous>, transform_indices = @transform_3, window_bounds = array<i64: 2, 64>}]} {
    %c0_i32 = arith.constant 0 : i32
    %0 = arith.cmpi eq, %arg0, %c0_i32 : i32
    %1 = arith.extui %0 : i1 to i32
    %c0_i32_0 = arith.constant 0 : i32
    %2 = arith.cmpi ne, %1, %c0_i32_0 : i32
    scf.if %2 {
      %cst_8 = arith.constant 0.000000e+00 : f32
      %11 = vector.broadcast %cst_8 : f32 to vector<2x64xf32>
      %c0_9 = arith.constant 0 : index
      %c0_10 = arith.constant 0 : index
      %12 = vector.load %arg5[%c0_9, %c0_10] : memref<2x64xf32, #tpu.memory_space<vmem>>, vector<2x64xf32>
      tpu.vector_store %arg5[%c0_9, %c0_10], %11 {strides = array<i32>} : memref<2x64xf32, #tpu.memory_space<vmem>>, vector<2x64xf32>,
    } else {
    }
    %c0 = arith.constant 0 : index
    %c0_1 = arith.constant 0 : index
    %3 = vector.load %arg5[%c0, %c0_1] : memref<2x64xf32, #tpu.memory_space<vmem>>, vector<2x64xf32>
    %c0_2 = arith.constant 0 : index
    %c0_3 = arith.constant 0 : index
    %c0_4 = arith.constant 0 : index
    %4 = vector.load %arg1[%c0_2, %c0_3, %c0_4] : memref<2x64x128xf32, #tpu.memory_space<vmem>>, vector<2x64x128xf32>
    %cst = arith.constant dense<0.000000e+00> : vector<2x64xf32>
    %5 = vector.multi_reduction <add>, %4, %cst [2] : vector<2x64x128xf32> to vector<2x64xf32>
    %6 = arith.addf %3, %5 : vector<2x64xf32>
    %c0_5 = arith.constant 0 : index
    %c0_6 = arith.constant 0 : index
    %7 = vector.load %arg5[%c0_5, %c0_6] : memref<2x64xf32, #tpu.memory_space<vmem>>, vector<2x64xf32>
    tpu.vector_store %arg5[%c0_5, %c0_6], %6 {strides = array<i32>} : memref<2x64xf32, #tpu.memory_space<vmem>>, vector<2x64xf32>,
    %c3_i32 = arith.constant 3 : i32
    %8 = arith.cmpi eq, %arg0, %c3_i32 : i32
    %9 = arith.extui %8 : i1 to i32
    %c0_i32_7 = arith.constant 0 : i32
    %10 = arith.cmpi ne, %9, %c0_i32_7 : i32
    scf.if %10 {
      %c0_8 = arith.constant 0 : index
      %c0_9 = arith.constant 0 : index
      %11 = vector.load %arg5[%c0_8, %c0_9] : memref<2x64xf32, #tpu.memory_space<vmem>>, vector<2x64xf32>
      %cst_10 = arith.constant 0.001953125 : f32
      %12 = vector.broadcast %cst_10 : f32 to vector<2x64xf32>
      %13 = arith.mulf %11, %12 : vector<2x64xf32>
      %c0_11 = arith.constant 0 : index
      %c0_12 = arith.constant 0 : index
      %14 = vector.load %arg2[%c0_11, %c0_12] : memref<64x4xf32, #tpu.memory_space<vmem>>, vector<64x4xf32>
      %cst_13 = arith.constant dense<0.000000e+00> : vector<2x4xf32>
      %15 = tpu.matmul %13, %14, %cst_13 {dimension_numbers = #tpu.dot_dimension_numbers<[1], [0], [0], [1], [0, 0, 1, 1], [], []>} : vector<2x64xf32>, vector<64x4xf32>, vector<2x4xf32> -> vector<2x4xf32>
      %cst_14 = arith.constant 0.000000e+00 : f32
      %16 = vector.broadcast %cst_14 : f32 to vector<2x4xf32>
      %17 = arith.maximumf %15, %16 : vector<2x4xf32>
      %c0_15 = arith.constant 0 : index
      %c0_16 = arith.constant 0 : index
      %18 = vector.load %arg3[%c0_15, %c0_16] : memref<4x64xf32, #tpu.memory_space<vmem>>, vector<4x64xf32>
      %cst_17 = arith.constant dense<0.000000e+00> : vector<2x64xf32>
      %19 = tpu.matmul %17, %18, %cst_17 {dimension_numbers = #tpu.dot_dimension_numbers<[1], [0], [0], [1], [0, 0, 1, 1], [], []>} : vector<2x4xf32>, vector<4x64xf32>, vector<2x64xf32> -> vector<2x64xf32>
      %20 = arith.negf %19 : vector<2x64xf32>
      %21 = math.exp %20 : vector<2x64xf32>
      %cst_18 = arith.constant 1.000000e+00 : f32
      %22 = vector.broadcast %cst_18 : f32 to vector<2x64xf32>
      %23 = arith.addf %22, %21 : vector<2x64xf32>
      %24 = arith.divf %22, %23 : vector<2x64xf32>
      %c0_19 = arith.constant 0 : index
      %c0_20 = arith.constant 0 : index
      %25 = vector.load %arg4[%c0_19, %c0_20] : memref<2x64xf32, #tpu.memory_space<vmem>>, vector<2x64xf32>
      tpu.vector_store %arg4[%c0_19, %c0_20], %24 {strides = array<i32>} : memref<2x64xf32, #tpu.memory_space<vmem>>, vector<2x64xf32>,
    } else {
    }
    return
  }
  func.func @transform_0(%arg0: i32) -> (i32, i32, i32) {
    %c0_i32 = arith.constant 0 : i32
    %c0_i32_0 = arith.constant 0 : i32
    %c0_i32_1 = arith.constant 0 : i32
    return %c0_i32, %c0_i32_0, %arg0 : i32, i32, i32
  }
  func.func @transform_1(%arg0: i32) -> (i32, i32) {
    %c0_i32 = arith.constant 0 : i32
    %c0_i32_0 = arith.constant 0 : i32
    %c0_i32_1 = arith.constant 0 : i32
    return %c0_i32, %c0_i32_0 : i32, i32
  }
  func.func @transform_2(%arg0: i32) -> (i32, i32) {
    %c0_i32 = arith.constant 0 : i32
    %c0_i32_0 = arith.constant 0 : i32
    %c0_i32_1 = arith.constant 0 : i32
    return %c0_i32, %c0_i32_0 : i32, i32
  }
  func.func @transform_3(%arg0: i32) -> (i32, i32) {
    %c0_i32 = arith.constant 0 : i32
    %c0_i32_0 = arith.constant 0 : i32
    %c0_i32_1 = arith.constant 0 : i32
    return %c0_i32, %c0_i32_0 : i32, i32
  }
}

</mosaic_0001>

<llo_original>
// kernel: tpu_custom_call.1
$region0: #{tpu_custom_call.1}
  #allocation0 [shape = 'u32[]', space=smem, size = 0x4, offset = 0x4, fixed_abs, tag = 'smem constant byte address 0x4 - core index']
  #allocation1 [shape = 'u32[144,128]{1,0:T(1,128)}', space=vmem, size = 0x12000, scoped, tag = 'internal scratch']
  #allocation2 [shape = 'f32[2,64]{1,0:T(2,128)}', space=vmem, size = 0x400, scoped, tag = 'scratch operand']
  %s0 = inlined_call_operand.hbm [shape: f32[2,64,512], index: 0, kind: input, shape index: {}]
  %s1 = inlined_call_operand.vmem [shape: f32[64,4], index: 1, kind: input, shape index: {}]
  %s2 = inlined_call_operand.vmem [shape: f32[4,64], index: 2, kind: input, shape index: {}]
  %s3 = inlined_call_operand.hbm [shape: f32[2,64], index: 3, kind: output, shape index: {}]
  %s4 = sld [smem:[#allocation0]]
  $region57: #{tpu_custom_call.1} parent=0
    _
  %s6 = ssub.s32 1, %s4
  %s7 = scalar_select 0, %s6, %s4
  $region1: #{tpu_custom_call.1} parent=0
    #allocation3 [shape = 'u8[131072]{0}', space=vmem, size = 0x20000, scoped, tag = 'input window, operand 0']
    #allocation4 [shape = 's32[2]{0}', space=sflag, size = 0x8, scoped, tag = 'scoped memory for tpu_custom_call.1']
    #allocation5 [shape = 's32[2]{0}', space=sflag, size = 0x8, scoped, tag = 'scoped memory for tpu_custom_call.1']
    #allocation6 [shape = 'u8[1024]{0}', space=vmem, size = 0x400, scoped, tag = 'output window, operand 0, single buffered']
    %8 = vsyncpa [#allocation4], 0
    %s9 = scalar_lea.sflag [#allocation4], 1
    %10 = vsyncpa %s9, 0
    %11 = vsyncpa [#allocation5], 0
    loop: start=0, step=1, limit=6
    $region2: #{tpu_custom_call.1} parent=1 // loop_pre_header
      _
    $region3: #{tpu_custom_call.1} parent=1 // loop_header
      %s13 = sphi 0, %s17
      %p14 = scmp.ge.s32.totalorder %s13, 6
      %s23 = sphi 0, %s25
      %s26 = sphi 0, %s23
      %s27 = sphi 0, %s26
      %s43 = sphi 0, %s27
      %s47 = sphi 0, %s47
      %s49 = sphi 0, %s47
      %s50 = sphi 0, %s49
      %s64 = sphi 0, %s50
      %s68 = sphi 0, %s68
      %s70 = sphi 0, %s68
      %s71 = sphi 0, %s70
      %s85 = sphi 0, %s71
      %s89 = sphi 0, %s89
      %s91 = sphi 0, %s89
      %s92 = sphi 0, %s91
      %s106 = sphi 0, %s92
    $region4: #{tpu_custom_call.1} parent=1 // loop_header_branch
      %16 = sbr.rel (%p14) target = $region8
    $region5: #{tpu_custom_call.1} parent=1 // loop_body
      %s18 = ssub.s32 %s13, 1
      %s19 = ssub.s32 %s13, 2
      %s20 = sadd.s32 %s13, 1
      %s21 = ssub.s32 %s13, %s20
      %p22 = scmp.eq.s32.totalorder %s21, 0
      %s24 = sadd.s32 %s23, 1
      %s25 = scalar_select %p22, %s23, %s24
      %p28 = pneg %p22
      %p29 = scmp.eq.s32.totalorder %s13, 3
      %p30 = por %p28, %p29
      %p31 = scmp.ne.s32.totalorder %s23, %s26
      %p32 = scmp.eq.s32.totalorder %s13, 0
      %p33 = por %p31, %p32
      %p34 = scmp.ne.s32.totalorder %s23, %s26
      %p35 = scmp.eq.s32.totalorder %s18, 3
      %p36 = por %p34, %p35
      %p37 = scmp.ne.s32.totalorder %s26, %s27
      %p38 = scmp.eq.s32.totalorder %s18, 0
      %p39 = por %p37, %p38
      %p40 = scmp.ne.s32.totalorder %s26, %s27
      %p41 = scmp.eq.s32.totalorder %s19, 3
      %p42 = por %p40, %p41
      %p44 = scmp.ne.s32.totalorder %s27, %s43
      %p45 = scmp.eq.s32.totalorder %s19, 0
      %p46 = por %p44, %p45
      %s48 = sadd.s32 %s47, 1
      %p51 = scmp.eq.s32.totalorder %s13, 3
      %p52 = scmp.ne.s32.totalorder %s47, %s49
      %p53 = scmp.eq.s32.totalorder %s13, 0
      %p54 = por %p52, %p53
      %p55 = scmp.ne.s32.totalorder %s47, %s49
      %p56 = scmp.eq.s32.totalorder %s18, 3
      %p57 = por %p55, %p56
      %p58 = scmp.ne.s32.totalorder %s49, %s50
      %p59 = scmp.eq.s32.totalorder %s18, 0
      %p60 = por %p58, %p59
      %p61 = scmp.ne.s32.totalorder %s49, %s50
      %p62 = scmp.eq.s32.totalorder %s19, 3
      %p63 = por %p61, %p62
      %p65 = scmp.ne.s32.totalorder %s50, %s64
      %p66 = scmp.eq.s32.totalorder %s19, 0
      %p67 = por %p65, %p66
      %s69 = sadd.s32 %s68, 1
      %p72 = scmp.eq.s32.totalorder %s13, 3
      %p73 = scmp.ne.s32.totalorder %s68, %s70
      %p74 = scmp.eq.s32.totalorder %s13, 0
      %p75 = por %p73, %p74
      %p76 = scmp.ne.s32.totalorder %s68, %s70
      %p77 = scmp.eq.s32.totalorder %s18, 3
      %p78 = por %p76, %p77
      %p79 = scmp.ne.s32.totalorder %s70, %s71
      %p80 = scmp.eq.s32.totalorder %s18, 0
      %p81 = por %p79, %p80
      %p82 = scmp.ne.s32.totalorder %s70, %s71
      %p83 = scmp.eq.s32.totalorder %s19, 3
      %p84 = por %p82, %p83
      %p86 = scmp.ne.s32.totalorder %s71, %s85
      %p87 = scmp.eq.s32.totalorder %s19, 0
      %p88 = por %p86, %p87
      %s90 = sadd.s32 %s89, 1
      %p93 = scmp.eq.s32.totalorder %s13, 3
      %p94 = scmp.ne.s32.totalorder %s89, %s91
      %p95 = scmp.eq.s32.totalorder %s13, 0
      %p96 = por %p94, %p95
      %p97 = scmp.ne.s32.totalorder %s89, %s91
      %p98 = scmp.eq.s32.totalorder %s18, 3
      %p99 = por %p97, %p98
      %p100 = scmp.ne.s32.totalorder %s91, %s92
      %p101 = scmp.eq.s32.totalorder %s18, 0
      %p102 = por %p100, %p101
      %p103 = scmp.ne.s32.totalorder %s91, %s92
      %p104 = scmp.eq.s32.totalorder %s19, 3
      %p105 = por %p103, %p104
      %p107 = scmp.ne.s32.totalorder %s92, %s106
      %p108 = scmp.eq.s32.totalorder %s19, 0
      %p109 = por %p107, %p108
      %p110 = scmp.le.s32.totalorder 1, %s13
      %p111 = scmp.lt.s32.totalorder %s13, 5
      %p112 = pnand %p110, %p111
      %p113 = pneg %p112
      // Predicated region
      $region9: #{tpu_custom_call.1} parent=5 // pred_check
        _
      $region10: #{tpu_custom_call.1} parent=5 // pred_check_branch
        %115 = sbr.rel (%p112) target = $region12
      $region11: #{tpu_custom_call.1} parent=5 // pred_region
        %s116 = ssub.s32 %s13, 1
        // Predicated region
        $region13: #{tpu_custom_call.1} parent=11 // pred_check
          %p117 = pneg %p60
        $region14: #{tpu_custom_call.1} parent=11 // pred_check_branch
          %119 = sbr.rel (%p117) target = $region16
        $region15: #{tpu_custom_call.1} parent=11 // pred_region
          _
        $region16: #{tpu_custom_call.1} parent=11 // pred_fallthru
          _
        // Predicated region
        $region17: #{tpu_custom_call.1} parent=11 // pred_check
          %p120 = pneg %p81
        $region18: #{tpu_custom_call.1} parent=11 // pred_check_branch
          %122 = sbr.rel (%p120) target = $region20
        $region19: #{tpu_custom_call.1} parent=11 // pred_region
          _
        $region20: #{tpu_custom_call.1} parent=11 // pred_fallthru
          _
      $region12: #{tpu_custom_call.1} parent=5 // pred_fallthru
        _
      %p123 = scmp.lt.s32.totalorder %s13, 4
      // Predicated region
      $region21: #{tpu_custom_call.1} parent=5 // pred_check
        %p124 = pneg %p123
      $region22: #{tpu_custom_call.1} parent=5 // pred_check_branch
        %126 = sbr.rel (%p124) target = $region24
      $region23: #{tpu_custom_call.1} parent=5 // pred_region
        // Predicated region
        $region25: #{tpu_custom_call.1} parent=23 // pred_check
          %p127 = pneg %p33
        $region26: #{tpu_custom_call.1} parent=23 // pred_check_branch
          %129 = sbr.rel (%p127) target = $region28
        $region27: #{tpu_custom_call.1} parent=23 // pred_region
          %s130 = sand.u32 %s23, 1
          %s131 = scalar_lea.sflag [#allocation4], %s130
          %s132 = sand.u32 %s23, 1
          %s133 = smul.addr %s132, 128
          %s134 = scalar_lea.vmem [#allocation3], %s133
          %s136 = ssub.s32 2048, 2048
          %137 = vsyncadd %s131, %s136
          %s138 = smul.addr %s13, 128
          %s139 = scalar_lea.hbm %s0, %s138
          %s140 = sshll.u32 %s134, 4
          %s141 = int_to_ptr.vmem [resolvable:$true] %s140
          %146 = dma.hbm_to_vmem [thread:$0]  %s139, 2048, %s141, %s131, 512, 128, 8
        $region28: #{tpu_custom_call.1} parent=23 // pred_fallthru
          _
      $region24: #{tpu_custom_call.1} parent=5 // pred_fallthru
        _
      %p147 = scmp.le.s32.totalorder 1, %s13
      %p148 = scmp.lt.s32.totalorder %s13, 5
      %p149 = pnand %p147, %p148
      %p150 = pneg %p149
      // Predicated region
      $region29: #{tpu_custom_call.1} parent=5 // pred_check
        _
      $region30: #{tpu_custom_call.1} parent=5 // pred_check_branch
        %152 = sbr.rel (%p149) target = $region32
      $region31: #{tpu_custom_call.1} parent=5 // pred_region
        %s153 = ssub.s32 %s13, 1
        %s154 = sand.u32 %s26, 1
        %s155 = scalar_lea.sflag [#allocation4], %s154
        %s156 = sand.u32 %s26, 1
        %s157 = smul.addr %s156, 128
        %s158 = scalar_lea.vmem [#allocation3], %s157
        // Predicated region
        $region33: #{tpu_custom_call.1} parent=31 // pred_check
          %p159 = pneg %p39
        $region34: #{tpu_custom_call.1} parent=31 // pred_check_branch
          %161 = sbr.rel (%p159) target = $region36
        $region35: #{tpu_custom_call.1} parent=31 // pred_region
          %162 = dma.done %s155, 2048
        $region36: #{tpu_custom_call.1} parent=31 // pred_fallthru
          _
        %s163 = sand.u32 %s26, 1
        %s164 = scalar_lea.sflag [#allocation4], %s163
        %s165 = sand.u32 %s26, 1
        %s166 = smul.addr %s165, 128
        %s167 = scalar_lea.vmem [#allocation3], %s166
        %p168 = pneg %p39
        %p169 = pneg %p36
        %p170 = pneg %p60
        %p171 = pneg %p57
        %p172 = pneg %p81
        %p173 = pneg %p78
        %p174 = pneg %p102
        %p175 = pneg %p99
        %p176 = scmp.eq.s32.totalorder %s18, 0
        // Predicated region
        $region37: #{tpu_custom_call.1} parent=31 // pred_check
          %p177 = pneg %p176
        $region38: #{tpu_custom_call.1} parent=31 // pred_check_branch
          %179 = sbr.rel (%p177) target = $region40
        $region39: #{tpu_custom_call.1} parent=31 // pred_region
          %vm180 = vcmask 517120
          %181 = vst.msk [vmem:[#allocation2] sm:$0x3] %vm180, 0.0
        $region40: #{tpu_custom_call.1} parent=31 // pred_fallthru
          _
        %v182 = vld [vmem:[#allocation2] sm:$0x3]
        %v183 = vld [vmem:[%s158] sm:$0xff]
        %v184 = vld [vmem:[%s158 + $0x8] sm:$0xff]
        %v185 = vld [vmem:[%s158 + $0x10] sm:$0xff]
        %v186 = vld [vmem:[%s158 + $0x18] sm:$0xff]
        %v187 = vld [vmem:[%s158 + $0x20] sm:$0xff]
        %v188 = vld [vmem:[%s158 + $0x28] sm:$0xff]
        %v189 = vld [vmem:[%s158 + $0x30] sm:$0xff]
        %v190 = vld [vmem:[%s158 + $0x38] sm:$0xff]
        %v191 = vld [vmem:[%s158 + $0x40] sm:$0xff]
        %v192 = vld [vmem:[%s158 + $0x48] sm:$0xff]
        %v193 = vld [vmem:[%s158 + $0x50] sm:$0xff]
        %v194 = vld [vmem:[%s158 + $0x58] sm:$0xff]
        %v195 = vld [vmem:[%s158 + $0x60] sm:$0xff]
        %v196 = vld [vmem:[%s158 + $0x68] sm:$0xff]
        %v197 = vld [vmem:[%s158 + $0x70] sm:$0xff]
        %v198 = vld [vmem:[%s158 + $0x78] sm:$0xff]
        %199 = vadd.xlane.f32.xlu0 %v183
        %v200 = vpop.xlane.xlu0 %199
        %201 = vadd.xlane.f32.xlu0 %v184
        %v202 = vpop.xlane.xlu0 %201
        %203 = vadd.xlane.f32.xlu0 %v185
        %v204 = vpop.xlane.xlu0 %203
        %205 = vadd.xlane.f32.xlu0 %v186
        %v206 = vpop.xlane.xlu0 %205
        %207 = vadd.xlane.f32.xlu0 %v187
        %v208 = vpop.xlane.xlu0 %207
        %209 = vadd.xlane.f32.xlu0 %v188
        %v210 = vpop.xlane.xlu0 %209
        %211 = vadd.xlane.f32.xlu0 %v189
        %v212 = vpop.xlane.xlu0 %211
        %213 = vadd.xlane.f32.xlu0 %v190
        %v214 = vpop.xlane.xlu0 %213
        %215 = vadd.xlane.f32.xlu0 %v191
        %v216 = vpop.xlane.xlu0 %215
        %217 = vadd.xlane.f32.xlu0 %v192
        %v218 = vpop.xlane.xlu0 %217
        %219 = vadd.xlane.f32.xlu0 %v193
        %v220 = vpop.xlane.xlu0 %219
        %221 = vadd.xlane.f32.xlu0 %v194
        %v222 = vpop.xlane.xlu0 %221
        %223 = vadd.xlane.f32.xlu0 %v195
        %v224 = vpop.xlane.xlu0 %223
        %225 = vadd.xlane.f32.xlu0 %v196
        %v226 = vpop.xlane.xlu0 %225
        %227 = vadd.xlane.f32.xlu0 %v197
        %v228 = vpop.xlane.xlu0 %227
        %229 = vadd.xlane.f32.xlu0 %v198
        %v230 = vpop.xlane.xlu0 %229
        %v247 = vlaneseq
        %v248 = vand.u32 %v247, 127
        %v249 = vlaneseq
        %v250 = vshrl.u32 %v249, 7
        %v251 = vsub.s32 %v248, %v250
        %v252 = vrot.slane %v200, %v251
        %v253 = vadd.s32 %v248, 4294967288
        %v254 = vlaneseq
        %v255 = vshrl.u32 %v254, 7
        %v256 = vsub.s32 %v253, %v255
        %v257 = vrot.slane %v202, %v256
        %vm258 = vcmask 130112
        %v259 = vsel %vm258, %v257, %v252
        %v260 = vadd.s32 %v248, 4294967280
        %v261 = vlaneseq
        %v262 = vshrl.u32 %v261, 7
        %v263 = vsub.s32 %v260, %v262
        %v264 = vrot.slane %v204, %v263
        %vm265 = vcmask 195712
        %v266 = vsel %vm265, %v264, %v259
        %v267 = vadd.s32 %v248, 4294967272
        %v268 = vlaneseq
        %v269 = vshrl.u32 %v268, 7
        %v270 = vsub.s32 %v267, %v269
        %v271 = vrot.slane %v206, %v270
        %vm272 = vcmask 261312
        %v273 = vsel %vm272, %v271, %v266
        %v274 = vadd.s32 %v248, 4294967264
        %v275 = vlaneseq
        %v276 = vshrl.u32 %v275, 7
        %v277 = vsub.s32 %v274, %v276
        %v278 = vrot.slane %v208, %v277
        %vm279 = vcmask 326912
        %v280 = vsel %vm279, %v278, %v273
        %v281 = vadd.s32 %v248, 4294967256
        %v282 = vlaneseq
        %v283 = vshrl.u32 %v282, 7
        %v284 = vsub.s32 %v281, %v283
        %v285 = vrot.slane %v210, %v284
        %vm286 = vcmask 392512
        %v287 = vsel %vm286, %v285, %v280
        %v288 = vadd.s32 %v248, 4294967248
        %v289 = vlaneseq
        %v290 = vshrl.u32 %v289, 7
        %v291 = vsub.s32 %v288, %v290
        %v292 = vrot.slane %v212, %v291
        %vm293 = vcmask 458112
        %v294 = vsel %vm293, %v292, %v287
        %v295 = vadd.s32 %v248, 4294967240
        %v296 = vlaneseq
        %v297 = vshrl.u32 %v296, 7
        %v298 = vsub.s32 %v295, %v297
        %v299 = vrot.slane %v214, %v298
        %vm300 = vcmask 523712
        %v301 = vsel %vm300, %v299, %v294
        %v302 = vlaneseq
        %v303 = vshrl.u32 %v302, 7
        %v304 = vsub.s32 %v248, %v303
        %v305 = vrot.slane %v216, %v304
        %v306 = vlaneseq
        %v307 = vshrl.u32 %v306, 7
        %v308 = vsub.s32 %v253, %v307
        %v309 = vrot.slane %v218, %v308
        %v310 = vsel %vm258, %v309, %v305
        %v311 = vlaneseq
        %v312 = vshrl.u32 %v311, 7
        %v313 = vsub.s32 %v260, %v312
        %v314 = vrot.slane %v220, %v313
        %v315 = vsel %vm265, %v314, %v310
        %v316 = vlaneseq
        %v317 = vshrl.u32 %v316, 7
        %v318 = vsub.s32 %v267, %v317
        %v319 = vrot.slane %v222, %v318
        %v320 = vsel %vm272, %v319, %v315
        %v321 = vlaneseq
        %v322 = vshrl.u32 %v321, 7
        %v323 = vsub.s32 %v274, %v322
        %v324 = vrot.slane %v224, %v323
        %v325 = vsel %vm279, %v324, %v320
        %v326 = vlaneseq
        %v327 = vshrl.u32 %v326, 7
        %v328 = vsub.s32 %v281, %v327
        %v329 = vrot.slane %v226, %v328
        %v330 = vsel %vm286, %v329, %v325
        %v331 = vlaneseq
        %v332 = vshrl.u32 %v331, 7
        %v333 = vsub.s32 %v288, %v332
        %v334 = vrot.slane %v228, %v333
        %v335 = vsel %vm293, %v334, %v330
        %v336 = vlaneseq
        %v337 = vshrl.u32 %v336, 7
        %v338 = vsub.s32 %v295, %v337
        %v339 = vrot.slane %v230, %v338
        %v340 = vsel %vm300, %v339, %v335
        %vm341 = vcmask 1041409
        %v342 = vsel %vm341, %v340, %v301
        %v344 = vadd.f32 %v182, %v342
        %vm345 = vcmask 517120
        %346 = vst.msk [vmem:[#allocation2] sm:$0x3] %vm345, %v344
        %p347 = scmp.eq.s32.totalorder %s18, 3
        // Predicated region
        $region41: #{tpu_custom_call.1} parent=31 // pred_check
          %p348 = pneg %p347
        $region42: #{tpu_custom_call.1} parent=31 // pred_check_branch
          %350 = sbr.rel (%p348) target = $region44
        $region43: #{tpu_custom_call.1} parent=31 // pred_region
          %v351 = vld [vmem:[#allocation2] sm:$0x3]
          %v352 = vmul.f32 %v351, 0.001953125
          %v353 = vld [vmem:[%s1] sm:$0xff]
          %v354 = vld [vmem:[%s1 + $0x8] sm:$0xff]
          %v355 = vld [vmem:[%s1 + $0x10] sm:$0xff]
          %v356 = vld [vmem:[%s1 + $0x18] sm:$0xff]
          %v357 = vld [vmem:[%s1 + $0x20] sm:$0xff]
          %v358 = vld [vmem:[%s1 + $0x28] sm:$0xff]
          %v359 = vld [vmem:[%s1 + $0x30] sm:$0xff]
          %v360 = vld [vmem:[%s1 + $0x38] sm:$0xff]
          %vm361 = vcmask 523264
          %v363 = vsel %vm361, %v352, 0
          %365 = vmatprep.subr.mxu0 0.0
          %366 = vmatpush1.msra.mxu0 0.0
          %367 = vmatprep.subr.mxu0 0.0
          %368 = vmatpush1.msra.mxu0 0.0
          %369 = vmatprep.subr.mxu0 0.0
          %370 = vmatpush1.msra.mxu0 0.0
          %371 = vmatprep.subr.mxu0 0.0
          %372 = vmatpush1.msra.mxu0 0.0
          %373 = vmatprep.subr.mxu0 0.0
          %374 = vmatpush1.msra.mxu0 0.0
          %375 = vmatprep.subr.mxu0 0.0
          %376 = vmatpush1.msra.mxu0 0.0
          %377 = vmatprep.subr.mxu0 0.0
          %378 = vmatpush1.msra.mxu0 0.0
          %379 = vmatprep.subr.mxu0 0.0
          %380 = vmatpush1.msra.mxu0 0.0
          %381 = vmatprep.subr.mxu0 0.0
          %382 = vmatpush1.msra.mxu0 %v360
          %383 = vmatprep.subr.mxu0 0.0
          %384 = vmatpush1.msra.mxu0 %v359
          %385 = vmatprep.subr.mxu0 0.0
          %386 = vmatpush1.msra.mxu0 %v358
          %387 = vmatprep.subr.mxu0 0.0
          %388 = vmatpush1.msra.mxu0 %v357
          %389 = vmatprep.subr.mxu0 0.0
          %390 = vmatpush1.msra.mxu0 %v356
          %391 = vmatprep.subr.mxu0 0.0
          %392 = vmatpush1.msra.mxu0 %v355
          %393 = vmatprep.subr.mxu0 0.0
          %394 = vmatpush1.msra.mxu0 %v354
          %395 = vmatprep.subr.mxu0 0.0
          %396 = vmatpush1.msra.mxu0 %v353
          %397 = vmatprep.subr.mxu0 0.0
          %398 = vmatpush2.msra.mxu0 0.0
          %399 = vmatprep.subr.mxu0 0.0
          %400 = vmatpush2.msra.mxu0 0.0
          %401 = vmatprep.subr.mxu0 0.0
          %402 = vmatpush2.msra.mxu0 0.0
          %403 = vmatprep.subr.mxu0 0.0
          %404 = vmatpush2.msra.mxu0 0.0
          %405 = vmatprep.subr.mxu0 0.0
          %406 = vmatpush2.msra.mxu0 0.0
          %407 = vmatprep.subr.mxu0 0.0
          %408 = vmatpush2.msra.mxu0 0.0
          %409 = vmatprep.subr.mxu0 0.0
          %410 = vmatpush2.msra.mxu0 0.0
          %411 = vmatprep.subr.mxu0 0.0
          %412 = vmatpush2.msra.mxu0 0.0
          %413 = vmatprep.subr.mxu0 0.0
          %414 = vmatpush2.msra.mxu0 0.0
          %415 = vmatprep.subr.mxu0 0.0
          %416 = vmatpush2.msra.mxu0 0.0
          %417 = vmatprep.subr.mxu0 0.0
          %418 = vmatpush2.msra.mxu0 0.0
          %419 = vmatprep.subr.mxu0 0.0
          %420 = vmatpush2.msra.mxu0 0.0
          %421 = vmatprep.subr.mxu0 0.0
          %422 = vmatpush2.msra.mxu0 0.0
          %423 = vmatprep.subr.mxu0 0.0
          %424 = vmatpush2.msra.mxu0 0.0
          %425 = vmatprep.subr.mxu0 0.0
          %426 = vmatpush2.msra.mxu0 0.0
          %427 = vmatprep.subr.mxu0 0.0
          %428 = vmatpush2.msra.mxu0 0.0
          %429 = vmatprep.mubr.f32.mxu0 0.0
          %430 = vmatmul.mubr.f32.gmra.mxu0 %v363
          %v431 = vpop.f32.mrf.mxu0
          %v432 = vadd.f32 0.0, %v431
          %v433 = vpop.f32.mrf.mxu0
          %434 = vdwg.mxu0
          %v435 = vmax.f32 %v432, 0.0
          %v436 = vld [vmem:[%s2] sm:$0xf]
          %vm437 = vcmask 31744
          %v439 = vsel %vm437, %v435, 0
          %vm441 = vcmask 1043456
          %v443 = vsel %vm441, %v436, 0
          %445 = vmatprep.subr.mxu0 0.0
          %446 = vmatpush1.msra.mxu0 0.0
          %447 = vmatprep.subr.mxu0 0.0
          %448 = vmatpush1.msra.mxu0 0.0
          %449 = vmatprep.subr.mxu0 0.0
          %450 = vmatpush1.msra.mxu0 0.0
          %451 = vmatprep.subr.mxu0 0.0
          %452 = vmatpush1.msra.mxu0 0.0
          %453 = vmatprep.subr.mxu0 0.0
          %454 = vmatpush1.msra.mxu0 0.0
          %455 = vmatprep.subr.mxu0 0.0
          %456 = vmatpush1.msra.mxu0 0.0
          %457 = vmatprep.subr.mxu0 0.0
          %458 = vmatpush1.msra.mxu0 0.0
          %459 = vmatprep.subr.mxu0 0.0
          %460 = vmatpush1.msra.mxu0 0.0
          %461 = vmatprep.subr.mxu0 0.0
          %462 = vmatpush1.msra.mxu0 0.0
          %463 = vmatprep.subr.mxu0 0.0
          %464 = vmatpush1.msra.mxu0 0.0
          %465 = vmatprep.subr.mxu0 0.0
          %466 = vmatpush1.msra.mxu0 0.0
          %467 = vmatprep.subr.mxu0 0.0
          %468 = vmatpush1.msra.mxu0 0.0
          %469 = vmatprep.subr.mxu0 0.0
          %470 = vmatpush1.msra.mxu0 0.0
          %471 = vmatprep.subr.mxu0 0.0
          %472 = vmatpush1.msra.mxu0 0.0
          %473 = vmatprep.subr.mxu0 0.0
          %474 = vmatpush1.msra.mxu0 0.0
          %475 = vmatprep.subr.mxu0 0.0
          %476 = vmatpush1.msra.mxu0 %v443
          %477 = vmatprep.subr.mxu0 0.0
          %478 = vmatpush2.msra.mxu0 0.0
          %479 = vmatprep.subr.mxu0 0.0
          %480 = vmatpush2.msra.mxu0 0.0
          %481 = vmatprep.subr.mxu0 0.0
          %482 = vmatpush2.msra.mxu0 0.0
          %483 = vmatprep.subr.mxu0 0.0
          %484 = vmatpush2.msra.mxu0 0.0
          %485 = vmatprep.subr.mxu0 0.0
          %486 = vmatpush2.msra.mxu0 0.0
          %487 = vmatprep.subr.mxu0 0.0
          %488 = vmatpush2.msra.mxu0 0.0
          %489 = vmatprep.subr.mxu0 0.0
          %490 = vmatpush2.msra.mxu0 0.0
          %491 = vmatprep.subr.mxu0 0.0
          %492 = vmatpush2.msra.mxu0 0.0
          %493 = vmatprep.subr.mxu0 0.0
          %494 = vmatpush2.msra.mxu0 0.0
          %495 = vmatprep.subr.mxu0 0.0
          %496 = vmatpush2.msra.mxu0 0.0
          %497 = vmatprep.subr.mxu0 0.0
          %498 = vmatpush2.msra.mxu0 0.0
          %499 = vmatprep.subr.mxu0 0.0
          %500 = vmatpush2.msra.mxu0 0.0
          %501 = vmatprep.subr.mxu0 0.0
          %502 = vmatpush2.msra.mxu0 0.0
          %503 = vmatprep.subr.mxu0 0.0
          %504 = vmatpush2.msra.mxu0 0.0
          %505 = vmatprep.subr.mxu0 0.0
          %506 = vmatpush2.msra.mxu0 0.0
          %507 = vmatprep.subr.mxu0 0.0
          %508 = vmatpush2.msra.mxu0 0.0
          %509 = vmatprep.mubr.f32.mxu0 0.0
          %510 = vmatmul.mubr.f32.gmra.mxu0 %v439
          %v511 = vpop.f32.mrf.mxu0
          %v512 = vadd.f32 0.0, %v511
          %v513 = vpop.f32.mrf.mxu0
          %514 = vdwg.mxu0
          %v515 = vxor.u32 %v512, 2147483648
          %v516 = vmul.f32 %v515, 1.442695
          %v517 = vpow.pop %v516
          %v518 = vadd.f32 %v517, 1.0
          %v519 = vrcp.pop %v518
          %v520 = vmul.f32 1.0, %v519
          %521 = vst.msk [vmem:[#allocation6] sm:$0x3] %vm345, %v520
        $region44: #{tpu_custom_call.1} parent=31 // pred_fallthru
          _
        // Predicated region
        $region45: #{tpu_custom_call.1} parent=31 // pred_check
          %p522 = pneg %p99
        $region46: #{tpu_custom_call.1} parent=31 // pred_check_branch
          %524 = sbr.rel (%p522) target = $region48
        $region47: #{tpu_custom_call.1} parent=31 // pred_region
          %s526 = ssub.s32 32, 32
          %527 = vsyncadd [#allocation5], %s526
          %s529 = sshll.u32 [#allocation6], 4
          %s530 = int_to_ptr.vmem [resolvable:$true] %s529
          %532 = dma.vmem_to_hbm [thread:$0]  %s530, 32, %s3, [#allocation5]
        $region48: #{tpu_custom_call.1} parent=31 // pred_fallthru
          _
        // Predicated region
        $region49: #{tpu_custom_call.1} parent=31 // pred_check
          %p533 = pneg %p99
        $region50: #{tpu_custom_call.1} parent=31 // pred_check_branch
          %535 = sbr.rel (%p533) target = $region52
        $region51: #{tpu_custom_call.1} parent=31 // pred_region
          %536 = dma.done [#allocation5], 32
        $region52: #{tpu_custom_call.1} parent=31 // pred_fallthru
          _
      $region32: #{tpu_custom_call.1} parent=5 // pred_fallthru
        _
      %p537 = scmp.le.s32.totalorder 2, %s13
      // Predicated region
      $region53: #{tpu_custom_call.1} parent=5 // pred_check
        %p538 = pneg %p537
      $region54: #{tpu_custom_call.1} parent=5 // pred_check_branch
        %540 = sbr.rel (%p538) target = $region56
      $region55: #{tpu_custom_call.1} parent=5 // pred_region
        %s541 = ssub.s32 %s13, 2
      $region56: #{tpu_custom_call.1} parent=5 // pred_fallthru
        _
    $region6: #{tpu_custom_call.1} parent=1 // loop_footer
      %s17 = sadd.s32 1, %s13
    $region7: #{tpu_custom_call.1} parent=1 // loop_footer_branch
      %12 = sbr.rel target = $region3
    $region8: #{tpu_custom_call.1} parent=1 // loop_exit
      _
    %542 = vsyncpa [#allocation4], 1
    %s543 = scalar_lea.sflag [#allocation4], 1
    %544 = vsyncpa %s543, 1
    %545 = vsyncpa [#allocation5], 1
    %s546 = scalar_lea.sflag [#allocation5], 1
    %547 = vsyncpa %s546, 1

</llo_original>
